<compile_context>
chip_gen: v7x
topology: tpu7x:2x2x1
jax: 0.10.0
libtpu: 0.0.40
codegen_flags: <defaults>
</compile_context>

<pallas_src>
import math
import functools

import jax
import jax.numpy as jnp
from jax.experimental import pallas as pl
from jax.experimental.pallas import tpu as pltpu


_VMEM_LIMIT = 64 * 1024 * 1024


# ----------------------------------------------------------------------------
# Row-tiled linear:  y = x @ w + b     (w stored as (in, out), i.e. torch W^T)
# ----------------------------------------------------------------------------
def _linear_kernel(x_ref, w_ref, b_ref, o_ref):
    o_ref[...] = (
        jnp.dot(x_ref[...], w_ref[...], preferred_element_type=jnp.float32)
        + b_ref[...]
    ).astype(o_ref.dtype)


def linear(x, w, b, *, tm=512):
    M, D_in = x.shape
    D_out = w.shape[1]
    tm = M if M <= tm else tm  # full block for small M, 512-row tiles otherwise
    b2 = b.reshape(1, D_out)
    return pl.pallas_call(
        _linear_kernel,
        out_shape=jax.ShapeDtypeStruct((M, D_out), x.dtype),
        grid=(pl.cdiv(M, tm),),
        in_specs=[
            pl.BlockSpec((tm, D_in), lambda i: (i, 0)),
            pl.BlockSpec((D_in, D_out), lambda i: (0, 0)),  # resident across grid
            pl.BlockSpec((1, D_out), lambda i: (0, 0)),     # resident across grid
        ],
        out_specs=pl.BlockSpec((tm, D_out), lambda i: (i, 0)),
        compiler_params=pltpu.CompilerParams(
            dimension_semantics=("parallel",),
            vmem_limit_bytes=_VMEM_LIMIT),
    )(x, w, b2)


# ----------------------------------------------------------------------------
# Flash-style multi-head attention core on merged-head (B, S, d_model) blocks
# ----------------------------------------------------------------------------
def _flash_attn_kernel(q_ref, k_ref, v_ref, o_ref, m_ref, l_ref, acc_ref,
                       *, h, d_k, scale):
    ki = pl.program_id(2)

    @pl.when(ki == 0)
    def _():
        m_ref[...] = jnp.full(m_ref.shape, -jnp.inf, dtype=m_ref.dtype)
        l_ref[...] = jnp.zeros(l_ref.shape, dtype=l_ref.dtype)
        acc_ref[...] = jnp.zeros(acc_ref.shape, dtype=acc_ref.dtype)

    q = q_ref[0]     # (TQ, d_model),  d_model = h * d_k
    k = k_ref[0]     # (TK, d_model)
    v = v_ref[0]     # (TK, d_model)

    # All h heads handled in one grid step (static unroll).
    for hh in range(h):
        sl = slice(hh * d_k, (hh + 1) * d_k)
        qh = q[:, sl] * scale                      # fold 1/sqrt(d_k) into q
        kh = k[:, sl]
        vh = v[:, sl]
        # QK^T without an explicit k.T: contract last dims directly on the MXU.
        s = jax.lax.dot_general(
            qh, kh, (((1,), (1,)), ((), ())),
            preferred_element_type=jnp.float32)    # (TQ, TK)

        m_prev = m_ref[hh]                                          # (TQ, 1)
        m_new = jnp.maximum(m_prev, jnp.max(s, axis=-1, keepdims=True))
        alpha = jnp.exp(m_prev - m_new)
        p = jnp.exp(s - m_new)                     # un-normalised probabilities
        # TODO(synk): mask (masked_fill -1e9) and dropout on `p` not applied
        # (forward reproduced for mask=None, eval-mode dropout).
        l_ref[hh] = alpha * l_ref[hh] + jnp.sum(p, axis=-1, keepdims=True)
        acc_ref[hh] = alpha * acc_ref[hh] + jnp.dot(
            p.astype(vh.dtype), vh, preferred_element_type=jnp.float32)
        m_ref[hh] = m_new

    @pl.when(ki == pl.num_programs(2) - 1)
    def _():
        # Deferred normalisation: reciprocal of l applied on the (TQ, d_k)
        # accumulators, then one lane-dense (TQ, d_model) store with heads
        # already in merged layout (no wrapper transpose afterwards).
        outs = []
        for hh in range(h):
            inv_l = pl.reciprocal(l_ref[hh], approx=False)
            outs.append((acc_ref[hh] * inv_l).astype(o_ref.dtype))
        o_ref[0] = jnp.concatenate(outs, axis=-1)


def flash_attention(q, k, v, *, h, tq=256, tk=256):
    """q, k, v, out: (B, S, d_model) with heads merged along the last dim."""
    B, S, d_model = q.shape
    d_k = d_model // h
    tq = S if S <= tq else tq
    tk = S if S <= tk else tk
    # TODO(synk): ragged S on the KV axis would need in-kernel masking of the
    # padded tail; require exact tiling for now.
    assert S % tq == 0 and S % tk == 0, "sequence length must tile evenly"
    nq, nk = S // tq, S // tk
    scale = 1.0 / math.sqrt(d_k)
    kernel = functools.partial(_flash_attn_kernel, h=h, d_k=d_k, scale=scale)
    return pl.pallas_call(
        kernel,
        out_shape=jax.ShapeDtypeStruct((B, S, d_model), q.dtype),
        grid=(B, nq, nk),
        in_specs=[
            pl.BlockSpec((1, tq, d_model), lambda b, qi, ki: (b, qi, 0)),
            pl.BlockSpec((1, tk, d_model), lambda b, qi, ki: (b, ki, 0)),
            pl.BlockSpec((1, tk, d_model), lambda b, qi, ki: (b, ki, 0)),
        ],
        out_specs=pl.BlockSpec((1, tq, d_model), lambda b, qi, ki: (b, qi, 0)),
        scratch_shapes=[
            pltpu.VMEM((h, tq, 1), jnp.float32),    # running max   m
            pltpu.VMEM((h, tq, 1), jnp.float32),    # running sum   l
            pltpu.VMEM((h, tq, d_k), jnp.float32),  # running acc   P @ V
        ],
        compiler_params=pltpu.CompilerParams(
            dimension_semantics=("parallel", "parallel", "arbitrary"),
            vmem_limit_bytes=_VMEM_LIMIT),
    )(q, k, v)


# ----------------------------------------------------------------------------
# MultiHeadedAttention forward (thin JAX glue, hot paths in Pallas)
# ----------------------------------------------------------------------------
def init_params(key, h, d_model, dtype=jnp.float32):
    """4 Linear(d_model, d_model) layers; weights stored as (in, out)."""
    params = []
    keys = jax.random.split(key, 8)
    bound = 1.0 / math.sqrt(d_model)  # PyTorch nn.Linear default init range
    for i in range(4):
        w = jax.random.uniform(keys[2 * i], (d_model, d_model),
                               minval=-bound, maxval=bound, dtype=dtype)
        b = jax.random.uniform(keys[2 * i + 1], (d_model,),
                               minval=-bound, maxval=bound, dtype=dtype)
        params.append((w, b))
    return params


def multi_headed_attention(params, query, key, value, h):
    """query/key/value: (B, S, d_model) -> (B, S, d_model)."""
    B, S, d_model = query.shape
    M = B * S
    (wq, bq), (wk, bk), (wv, bv), (wo, bo) = params

    if query is key and key is value:
        # Fused QKV projection: one pass over the activation, 3x wider matmul.
        w_qkv = jnp.concatenate([wq, wk, wv], axis=1)     # (d_model, 3*d_model)
        b_qkv = jnp.concatenate([bq, bk, bv])
        qkv = linear(query.reshape(M, d_model), w_qkv, b_qkv)
        q2d = qkv[:, :d_model]
        k2d = qkv[:, d_model:2 * d_model]
        v2d = qkv[:, 2 * d_model:]
    else:
        q2d = linear(query.reshape(M, d_model), wq, bq)
        k2d = linear(key.reshape(M, d_model), wk, bk)
        v2d = linear(value.reshape(M, d_model), wv, bv)

    # Merged-head layout throughout -> free reshapes only, no transposes.
    q = q2d.reshape(B, S, d_model)
    k = k2d.reshape(B, S, d_model)
    v = v2d.reshape(B, S, d_model)

    x = flash_attention(q, k, v, h=h)                     # (B, S, d_model)
    out = linear(x.reshape(M, d_model), wo, bo)           # output projection
    return out.reshape(B, S, d_model)


# ----------------------------------------------------------------------------
# Pure-JAX reference for verification
# ----------------------------------------------------------------------------
def reference(params, query, key, value, h):
    B, S, d_model = query.shape
    d_k = d_model // h

    def project(x, w, b):
        y = x.reshape(B * S, d_model) @ w + b
        return y.reshape(B, S, h, d_k).transpose(0, 2, 1, 3)

    q = project(query, *params[0])
    k = project(key,   *params[1])
    v = project(value, *params[2])
    s = jnp.einsum("bhqd,bhkd->bhqk", q, k) / math.sqrt(d_k)
    p = jax.nn.softmax(s, axis=-1)
    x = jnp.einsum("bhqk,bhkd->bhqd", p, v)
    x = x.transpose(0, 2, 1, 3).reshape(B * S, d_model)
    w4, b4 = params[3]
    return (x @ w4 + b4).reshape(B, S, d_model)


if __name__ == "__main__":
    h = 4
    d_model = 32
    B, S = 2, 8

    root = jax.random.PRNGKey(0)
    kp, kq, kk, kv = jax.random.split(root, 4)
    params = init_params(kp, h, d_model)
    query = jax.random.normal(kq, (B, S, d_model), dtype=jnp.float32)
    key_t = jax.random.normal(kk, (B, S, d_model), dtype=jnp.float32)
    value = jax.random.normal(kv, (B, S, d_model), dtype=jnp.float32)

    # Cross-attention path (distinct q/k/v -> three row-tiled projections).
    out = multi_headed_attention(params, query, key_t, value, h)
    out = jax.block_until_ready(out)
    ref = reference(params, query, key_t, value, h)
    assert out.shape == (B, S, d_model)
    assert jnp.allclose(out, ref, atol=1e-5, rtol=1e-5), "cross-attn mismatch"

    # Self-attention path (q is k is v -> fused QKV projection).
    out_sa = jax.block_until_ready(
        multi_headed_attention(params, query, query, query, h))
    ref_sa = reference(params, query, query, query, h)
    assert jnp.allclose(out_sa, ref_sa, atol=1e-5, rtol=1e-5), "self-attn mismatch"

    print("KERNEL_OK")
</pallas_src>

<mosaic_0001>
module attributes {stable_mosaic.version = 11 : i64} {
  func.func @_linear_kernel(%arg0: i32, %arg1: memref<16x32xf32, #tpu.memory_space<vmem>>, %arg2: memref<32x32xf32, #tpu.memory_space<vmem>>, %arg3: memref<1x32xf32, #tpu.memory_space<vmem>>, %arg4: memref<16x32xf32, #tpu.memory_space<vmem>>) attributes {dimension_semantics = [#tpu.dimension_semantics<parallel>], iteration_bounds = array<i64: 1>, scalar_prefetch = 0 : i64, scratch_operands = 0 : i64, tpu.core_type = #tpu.core_type<tc>, window_params = [{transform_indices = @transform_0, window_bounds = array<i64: 16, 32>}, {pipeline_mode = #tpu.pipeline_mode<synchronous>, transform_indices = @transform_1, window_bounds = array<i64: 32, 32>}, {pipeline_mode = #tpu.pipeline_mode<synchronous>, transform_indices = @transform_2, window_bounds = array<i64: 1, 32>}, {transform_indices = @transform_3, window_bounds = array<i64: 16, 32>}]} {
    %c0 = arith.constant 0 : index
    %c0_0 = arith.constant 0 : index
    %0 = vector.load %arg1[%c0, %c0_0] : memref<16x32xf32, #tpu.memory_space<vmem>>, vector<16x32xf32>
    %c0_1 = arith.constant 0 : index
    %c0_2 = arith.constant 0 : index
    %1 = vector.load %arg2[%c0_1, %c0_2] : memref<32x32xf32, #tpu.memory_space<vmem>>, vector<32x32xf32>
    %cst = arith.constant dense<0.000000e+00> : vector<16x32xf32>
    %2 = tpu.matmul %0, %1, %cst {dimension_numbers = #tpu.dot_dimension_numbers<[1], [0], [0], [1], [0, 0, 1, 1], [], []>} : vector<16x32xf32>, vector<32x32xf32>, vector<16x32xf32> -> vector<16x32xf32>
    %c0_3 = arith.constant 0 : index
    %c0_4 = arith.constant 0 : index
    %3 = vector.load %arg3[%c0_3, %c0_4] : memref<1x32xf32, #tpu.memory_space<vmem>>, vector<1x32xf32>
    %4 = vector.broadcast %3 : vector<1x32xf32> to vector<16x32xf32>
    %5 = arith.addf %2, %4 : vector<16x32xf32>
    %c0_5 = arith.constant 0 : index
    %c0_6 = arith.constant 0 : index
    %6 = vector.load %arg4[%c0_5, %c0_6] : memref<16x32xf32, #tpu.memory_space<vmem>>, vector<16x32xf32>
    tpu.vector_store %arg4[%c0_5, %c0_6], %5 {strides = array<i32>} : memref<16x32xf32, #tpu.memory_space<vmem>>, vector<16x32xf32>,
    return
  }
  func.func @transform_0(%arg0: i32) -> (i32, i32) {
    %c0_i32 = arith.constant 0 : i32
    %c0_i32_0 = arith.constant 0 : i32
    return %arg0, %c0_i32 : i32, i32
  }
  func.func @transform_1(%arg0: i32) -> (i32, i32) {
    %c0_i32 = arith.constant 0 : i32
    %c0_i32_0 = arith.constant 0 : i32
    %c0_i32_1 = arith.constant 0 : i32
    return %c0_i32, %c0_i32_0 : i32, i32
  }
  func.func @transform_2(%arg0: i32) -> (i32, i32) {
    %c0_i32 = arith.constant 0 : i32
    %c0_i32_0 = arith.constant 0 : i32
    %c0_i32_1 = arith.constant 0 : i32
    return %c0_i32, %c0_i32_0 : i32, i32
  }
  func.func @transform_3(%arg0: i32) -> (i32, i32) {
    %c0_i32 = arith.constant 0 : i32
    %c0_i32_0 = arith.constant 0 : i32
    return %arg0, %c0_i32 : i32, i32
  }
}

</mosaic_0001>

<llo_original>
// kernel: tpu_custom_call.1
$region0: #{tpu_custom_call.1}
  #allocation0 [shape = 'u32[]', space=smem, size = 0x4, offset = 0x4, fixed_abs, tag = 'smem constant byte address 0x4 - core index']
  #allocation1 [shape = 'u32[144,128]{1,0:T(1,128)}', space=vmem, size = 0x12000, scoped, tag = 'internal scratch']
  %s0 = inlined_call_operand.hbm [shape: f32[16,32], index: 0, kind: input, shape index: {}]
  %s1 = inlined_call_operand.hbm [shape: f32[32,32], index: 1, kind: input, shape index: {}]
  %s2 = inlined_call_operand.hbm [shape: f32[1,32], index: 2, kind: input, shape index: {}]
  %s3 = inlined_call_operand.hbm [shape: f32[16,32], index: 3, kind: output, shape index: {}]
  %s4 = sld [smem:[#allocation0]]
  $region34: #{tpu_custom_call.1} parent=0
    _
  %s6 = ssub.s32 1, %s4
  %s7 = scalar_select 0, %s6, %s4
  $region1: #{tpu_custom_call.1} parent=0
    #allocation2 [shape = 'u8[8192]{0}', space=vmem, size = 0x2000, scoped, tag = 'input window, operand 0, single buffered']
    #allocation3 [shape = 's32[1]{0}', space=sflag, size = 0x4, scoped, tag = 'scoped memory for tpu_custom_call.1']
    #allocation4 [shape = 's32[1]{0}', space=sflag, size = 0x4, scoped, tag = 'scoped memory for tpu_custom_call.1']
    #allocation5 [shape = 'u8[16384]{0}', space=vmem, size = 0x4000, scoped, tag = 'input window, operand 1, single buffered']
    #allocation6 [shape = 's32[1]{0}', space=sflag, size = 0x4, scoped, tag = 'scoped memory for tpu_custom_call.1']
    #allocation7 [shape = 'u8[512]{0}', space=vmem, size = 0x400, scoped, tag = 'input window, operand 2, single buffered']
    #allocation8 [shape = 'u8[8192]{0}', space=vmem, size = 0x2000, scoped, tag = 'output window, operand 0, single buffered']
    %8 = vsyncpa [#allocation3], 0
    %9 = vsyncpa [#allocation6], 0
    %10 = vsyncpa [#allocation4], 0
    // Predicated region
    $region2: #{tpu_custom_call.1} parent=1 // pred_check
      _
    $region3: #{tpu_custom_call.1} parent=1 // pred_check_branch
      %12 = sbr.rel (0) target = $region5
    $region4: #{tpu_custom_call.1} parent=1 // pred_region
      %s14 = ssub.s32 256, 256
      %15 = vsyncadd [#allocation3], %s14
      %s16 = sshll.u32 [#allocation2], 4
      %s17 = int_to_ptr.vmem [resolvable:$true] %s16
      %22 = dma.hbm_to_vmem [thread:$0]  %s0, 256, %s17, [#allocation3], 128, 128, 8
    $region5: #{tpu_custom_call.1} parent=1 // pred_fallthru
      _
    // Predicated region
    $region6: #{tpu_custom_call.1} parent=1 // pred_check
      _
    $region7: #{tpu_custom_call.1} parent=1 // pred_check_branch
      %24 = sbr.rel (0) target = $region9
    $region8: #{tpu_custom_call.1} parent=1 // pred_region
      %s26 = ssub.s32 512, 512
      %27 = vsyncadd [#allocation6], %s26
      %s28 = sshll.u32 [#allocation5], 4
      %s29 = int_to_ptr.vmem [resolvable:$true] %s28
      %34 = dma.hbm_to_vmem [thread:$0]  %s1, 512, %s29, [#allocation6], 128, 128, 8
    $region9: #{tpu_custom_call.1} parent=1 // pred_fallthru
      _
    // Predicated region
    $region10: #{tpu_custom_call.1} parent=1 // pred_check
      _
    $region11: #{tpu_custom_call.1} parent=1 // pred_check_branch
      %36 = sbr.rel (0) target = $region13
    $region12: #{tpu_custom_call.1} parent=1 // pred_region
      %s38 = ssub.s32 16, 16
      %39 = vsyncadd [#allocation6], %s38
      %s41 = sshll.u32 [#allocation7], 4
      %s42 = int_to_ptr.vmem [resolvable:$true] %s41
      %44 = dma.hbm_to_vmem [thread:$0]  %s2, 16, %s42, [#allocation6]
    $region13: #{tpu_custom_call.1} parent=1 // pred_fallthru
      _
    // Predicated region
    $region14: #{tpu_custom_call.1} parent=1 // pred_check
      _
    $region15: #{tpu_custom_call.1} parent=1 // pred_check_branch
      %46 = sbr.rel (0) target = $region17
    $region16: #{tpu_custom_call.1} parent=1 // pred_region
      %47 = dma.done [#allocation3], 256
    $region17: #{tpu_custom_call.1} parent=1 // pred_fallthru
      _
    // Predicated region
    $region18: #{tpu_custom_call.1} parent=1 // pred_check
      _
    $region19: #{tpu_custom_call.1} parent=1 // pred_check_branch
      %49 = sbr.rel (0) target = $region21
    $region20: #{tpu_custom_call.1} parent=1 // pred_region
      %50 = dma.done [#allocation6], 512
    $region21: #{tpu_custom_call.1} parent=1 // pred_fallthru
      _
    // Predicated region
    $region22: #{tpu_custom_call.1} parent=1 // pred_check
      _
    $region23: #{tpu_custom_call.1} parent=1 // pred_check_branch
      %52 = sbr.rel (0) target = $region25
    $region24: #{tpu_custom_call.1} parent=1 // pred_region
      %53 = dma.done [#allocation6], 16
    $region25: #{tpu_custom_call.1} parent=1 // pred_fallthru
      _
    %v54 = vld [vmem:[#allocation2] sm:$0xff]
    %v55 = vld [vmem:[#allocation2 + $0x8] sm:$0xff]
    %v56 = vld [vmem:[#allocation5] sm:$0xff]
    %v57 = vld [vmem:[#allocation5 + $0x8] sm:$0xff]
    %v58 = vld [vmem:[#allocation5 + $0x10] sm:$0xff]
    %v59 = vld [vmem:[#allocation5 + $0x18] sm:$0xff]
    %v60 = vld [vmem:[#allocation7] sm:$0x1]
    %v62 = vlaneseq
    %v63 = vshrl.u32 %v62, 7
    %v64 = vsub.s32 0, %v63
    %v65 = vrot.slane %v60, %v64
    %vm67 = vcmask 261120
    %v69 = vsel %vm67, %v54, 0
    %v72 = vsel %vm67, %v55, 0
    %74 = vmatprep.subr.mxu0 0.0
    %75 = vmatpush1.msra.mxu0 %v56
    %76 = vmatprep.subr.mxu0 0.0
    %77 = vmatpush1.msra.mxu0 %v57
    %78 = vmatprep.subr.mxu0 0.0
    %79 = vmatpush1.msra.mxu0 %v58
    %80 = vmatprep.subr.mxu0 0.0
    %81 = vmatpush1.msra.mxu0 %v59
    %82 = vmatprep.subr.mxu0 0.0
    %83 = vmatpush1.msra.mxu0 0.0
    %84 = vmatprep.subr.mxu0 0.0
    %85 = vmatpush1.msra.mxu0 0.0
    %86 = vmatprep.subr.mxu0 0.0
    %87 = vmatpush1.msra.mxu0 0.0
    %88 = vmatprep.subr.mxu0 0.0
    %89 = vmatpush1.msra.mxu0 0.0
    %90 = vmatprep.subr.mxu0 0.0
    %91 = vmatpush1.msra.mxu0 0.0
    %92 = vmatprep.subr.mxu0 0.0
    %93 = vmatpush1.msra.mxu0 0.0
    %94 = vmatprep.subr.mxu0 0.0
    %95 = vmatpush1.msra.mxu0 0.0
    %96 = vmatprep.subr.mxu0 0.0
    %97 = vmatpush1.msra.mxu0 0.0
    %98 = vmatprep.subr.mxu0 0.0
    %99 = vmatpush1.msra.mxu0 0.0
    %100 = vmatprep.subr.mxu0 0.0
    %101 = vmatpush1.msra.mxu0 0.0
    %102 = vmatprep.subr.mxu0 0.0
    %103 = vmatpush1.msra.mxu0 0.0
    %104 = vmatprep.subr.mxu0 0.0
    %105 = vmatpush1.msra.mxu0 0.0
    %106 = vmatprep.subr.mxu0 0.0
    %107 = vmatpush1.msra.mxu0 0.0
    %108 = vmatprep.subr.mxu0 0.0
    %109 = vmatpush1.msra.mxu0 0.0
    %110 = vmatprep.subr.mxu0 0.0
    %111 = vmatpush1.msra.mxu0 0.0
    %112 = vmatprep.subr.mxu0 0.0
    %113 = vmatpush1.msra.mxu0 0.0
    %114 = vmatprep.subr.mxu0 0.0
    %115 = vmatpush1.msra.mxu0 0.0
    %116 = vmatprep.subr.mxu0 0.0
    %117 = vmatpush1.msra.mxu0 0.0
    %118 = vmatprep.subr.mxu0 0.0
    %119 = vmatpush1.msra.mxu0 0.0
    %120 = vmatprep.subr.mxu0 0.0
    %121 = vmatpush1.msra.mxu0 0.0
    %122 = vmatprep.subr.mxu0 0.0
    %123 = vmatpush1.msra.mxu0 0.0
    %124 = vmatprep.subr.mxu0 0.0
    %125 = vmatpush1.msra.mxu0 0.0
    %126 = vmatprep.subr.mxu0 0.0
    %127 = vmatpush1.msra.mxu0 0.0
    %128 = vmatprep.subr.mxu0 0.0
    %129 = vmatpush1.msra.mxu0 0.0
    %130 = vmatprep.subr.mxu0 0.0
    %131 = vmatpush1.msra.mxu0 0.0
    %132 = vmatprep.subr.mxu0 0.0
    %133 = vmatpush1.msra.mxu0 0.0
    %134 = vmatprep.subr.mxu0 0.0
    %135 = vmatpush1.msra.mxu0 0.0
    %136 = vmatprep.subr.mxu0 0.0
    %137 = vmatpush1.msra.mxu0 0.0
    %138 = vmatprep.mubr.f32.mxu0 0.0
    %139 = vmatmul.mubr.f32.gmra.mrb[0].mxu0 %v69
    %v140 = vpop.f32.mrb[0].mxu0
    %v141 = vadd.f32 %v65, %v140
    %v142 = vpop.f32.mrb[0].mxu0
    %143 = vmatprep.mubr.f32.mxu0 0.0
    %144 = vmatmul.mubr.f32.gmra.mrb[0].mxu0 %v72
    %v145 = vpop.f32.mrb[0].mxu0
    %v146 = vadd.f32 %v65, %v145
    %v147 = vpop.f32.mrb[0].mxu0
    %148 = vdwg.mxu0
    %149 = vst.msk [vmem:[#allocation8] sm:$0xff] %vm67, %v141
    %150 = vst.msk [vmem:[#allocation8 + $0x8] sm:$0xff] %vm67, %v146
    // Predicated region
    $region26: #{tpu_custom_call.1} parent=1 // pred_check
      _
    $region27: #{tpu_custom_call.1} parent=1 // pred_check_branch
      %152 = sbr.rel (0) target = $region29
    $region28: #{tpu_custom_call.1} parent=1 // pred_region
      %s154 = ssub.s32 256, 256
      %155 = vsyncadd [#allocation4], %s154
      %s156 = sshll.u32 [#allocation8], 4
      %s157 = int_to_ptr.vmem [resolvable:$true] %s156
      %162 = dma.vmem_to_hbm [thread:$0]  %s157, 256, %s3, [#allocation4], 128, 128, 8
    $region29: #{tpu_custom_call.1} parent=1 // pred_fallthru
      _
    // Predicated region
    $region30: #{tpu_custom_call.1} parent=1 // pred_check
      _
    $region31: #{tpu_custom_call.1} parent=1 // pred_check_branch
      %164 = sbr.rel (0) target = $region33
    $region32: #{tpu_custom_call.1} parent=1 // pred_region
      %165 = dma.done [#allocation4], 256
    $region33: #{tpu_custom_call.1} parent=1 // pred_fallthru
      _
    %166 = vsyncpa [#allocation3], 1
    %167 = vsyncpa [#allocation6], 1
    %168 = vsyncpa [#allocation4], 1

</llo_original>
